<compile_context>
chip_gen: v5e
topology: v5e:2x2
jax: 0.10.0
libtpu: 0.0.40
codegen_flags: <defaults>
</compile_context>

<pallas_src>
import functools

import jax
import jax.numpy as jnp
from jax.experimental import pallas as pl
from jax.experimental.pallas import tpu as pltpu


def _round_up(n, m):
    return ((n + m - 1) // m) * m


def _mlp_kernel(out_dims, total_rows, x_ref, *refs):
    """Fused forward for one batch tile: [Linear+ReLU]*(L-1) -> Linear -> Softmax.

    refs = (wT_0, ..., wT_{L-1}, b_packed, o_ref)
      x_ref    : (TILE_B, d0)            f32  (natural layout; cast to bf16 here)
      wT_i     : (d_{i+1}, d_i)          bf16 (VMEM-resident, constant index_map)
      b_packed : (max_out, L)            f32  (column i = bias of layer i, zero padded)
      o_ref    : (out_dims[-1], TILE_B)  f32  (transposed, lane-dense output)
    """
    o_ref = refs[-1]
    b_ref = refs[-2]
    w_refs = refs[:-2]
    n_layers = len(w_refs)

    tile_b = x_ref.shape[0]
    needs_mask = (total_rows % tile_b) != 0          # static (trace-time) decision
    if needs_mask:
        base = pl.program_id(0) * tile_b
        lane = jax.lax.broadcasted_iota(jnp.int32, (1, tile_b), 1)
        valid = (base + lane) < total_rows           # (1, TILE_B): real batch columns

    h = None
    for i in range(n_layers):
        d_out = out_dims[i]
        if i == 0:
            # (d1, d0) . (TILE_B, d0)^T -> (d1, TILE_B): batch moves onto the lane axis
            # without an explicit transpose of the x tile.
            z = jax.lax.dot_general(
                w_refs[0][...], x_ref[...].astype(jnp.bfloat16),
                (((1,), (1,)), ((), ())), preferred_element_type=jnp.float32)
        else:
            z = jax.lax.dot_general(
                w_refs[i][...], h.astype(jnp.bfloat16),
                (((1,), (0,)), ((), ())), preferred_element_type=jnp.float32)
        z = z + b_ref[0:d_out, i:i + 1]              # f32 bias column, broadcast over lanes
        if i < n_layers - 1:
            z = jnp.maximum(z, 0.0)                  # downLayer activation (ReLU), f32
        if i == 0 and needs_mask:
            z = jnp.where(valid, z, 0.0)             # kill garbage tail columns once
        h = z

    # Numerically stable softmax along the feature axis (axis 0), fully lane-dense f32.
    m = jnp.max(h, axis=0, keepdims=True)
    e = jnp.exp(h - m)
    denom = jnp.sum(e, axis=0, keepdims=True)
    o_ref[...] = (e * pl.reciprocal(denom, approx=True)).astype(o_ref.dtype)


def mlp_forward(x, weights, biases, *, tile_b=2048):
    """x: (B, inputDim) f32.  weights[i]: (in_i, out_i), biases[i]: (1, out_i) or (out_i,).

    Returns softmax(MLP(x)) of shape (B, outputDim), matching the torch module.
    """
    n_layers = len(weights)
    assert n_layers == len(biases) and n_layers >= 1
    in_dim = int(weights[0].shape[0])
    out_dim = int(weights[-1].shape[1])
    B = int(x.shape[0])
    assert int(x.shape[1]) == in_dim, "input feature dim mismatch"
    for i in range(n_layers - 1):
        assert int(weights[i].shape[1]) == int(weights[i + 1].shape[0]), "layer dim chain mismatch"

    # Batch tile: multiple of 128 (lane-dense transposed output blocks), capped at the
    # rounded-up batch; split two ways when possible so a v7x megacore gets >= 2
    # balanced grid steps. VMEM footprint at 2048: ~0.5 MiB double-buffered -> no
    # vmem_limit override needed on any generation.
    tile_b = min(_round_up(max(tile_b, 128), 128), _round_up(B, 128))
    half = _round_up((B + 1) // 2, 128)
    if B > 128 and tile_b > half:
        tile_b = half
    n_tiles = (B + tile_b - 1) // tile_b

    out_dims = tuple(int(w.shape[1]) for w in weights)
    max_out = max(out_dims)

    # Transposed bf16 weights (tiny, one-time) -> VMEM-resident via constant index_map.
    w_t = [jnp.asarray(w, jnp.bfloat16).T for w in weights]
    # Packed biases: column i = layer-i bias, zero padded to max_out rows (f32).
    b_packed = jnp.zeros((max_out, n_layers), jnp.float32)
    for i, b in enumerate(biases):
        b_col = jnp.asarray(b, jnp.float32).reshape(-1)
        b_packed = b_packed.at[: b_col.shape[0], i].set(b_col)

    x_spec = pl.BlockSpec((tile_b, in_dim), lambda i: (i, 0))
    w_specs = [pl.BlockSpec(tuple(w.shape), lambda i: (0, 0)) for w in w_t]
    b_spec = pl.BlockSpec((max_out, n_layers), lambda i: (0, 0))
    o_spec = pl.BlockSpec((out_dim, tile_b), lambda i: (0, i))

    flops = 2 * B * sum(int(w.shape[0]) * int(w.shape[1]) for w in weights)
    bytes_accessed = (x.size * x.dtype.itemsize
                      + sum(w.size * 2 for w in w_t)
                      + b_packed.size * 4
                      + B * out_dim * 4)
    cost = pl.CostEstimate(flops=flops,
                           transcendentals=B * out_dim,
                           bytes_accessed=int(bytes_accessed))

    kernel = functools.partial(_mlp_kernel, out_dims, B)

    out_t = pl.pallas_call(
        kernel,
        out_shape=jax.ShapeDtypeStruct((out_dim, B), jnp.float32),
        grid=(n_tiles,),
        in_specs=[x_spec, *w_specs, b_spec],
        out_specs=o_spec,
        compiler_params=pltpu.CompilerParams(
            dimension_semantics=("parallel",)),   # shards tiles across both TCs on v7x
        cost_estimate=cost,
    )(x, *w_t, b_packed)

    # Lane-dense (out_dim, B) back to the caller-facing (B, out_dim); this stream is
    # out_dim/in_dim (= 1/8 here) the size of x, so the transpose is cheap.
    return out_t.T


def make_params(key, input_dim, output_dim, num_down_layer):
    """Deterministic parameter init mirroring the torch module's shapes."""
    assert input_dim % (2 ** num_down_layer) == 0, (
        "inputDim must be divisible by 2**num_downLayer for the halving chain")
    dims = [input_dim // (2 ** i) for i in range(num_down_layer + 1)]
    layer_shapes = [(dims[i], dims[i + 1]) for i in range(num_down_layer)]
    layer_shapes.append((dims[-1], output_dim))  # final Linear

    weights, biases = [], []
    for (d_in, d_out) in layer_shapes:
        key, kw, kb = jax.random.split(key, 3)
        bound = 1.0 / jnp.sqrt(d_in)
        w = jax.random.uniform(kw, (d_in, d_out), jnp.float32, -bound, bound)
        b = jax.random.uniform(kb, (1, d_out), jnp.float32, -bound, bound)
        weights.append(w)
        biases.append(b)
    return weights, biases


def reference_forward(x, weights, biases):
    h = x
    for i, (w, b) in enumerate(zip(weights, biases)):
        h = h @ w + b
        if i < len(weights) - 1:
            h = jnp.maximum(h, 0.0)
    return jax.nn.softmax(h, axis=-1)


if __name__ == "__main__":
    INPUT_DIM = 32
    OUTPUT_DIM = 4
    NUM_DOWN_LAYER = 2
    BATCH = 200   # not a multiple of the tile: exercises the in-kernel tail mask
                  # (tile logic picks tile_b=128 -> 2 grid steps, both TCs busy on v7x)

    key = jax.random.PRNGKey(0)
    key, kx = jax.random.split(key)
    x = jax.random.normal(kx, (BATCH, INPUT_DIM), jnp.float32)

    weights, biases = make_params(key, INPUT_DIM, OUTPUT_DIM, NUM_DOWN_LAYER)

    out = mlp_forward(x, weights, biases)
    out = jax.block_until_ready(out)

    ref = reference_forward(x, weights, biases)  # pure-f32 reference
    assert out.shape == (BATCH, OUTPUT_DIM)
    # Tolerance covers bf16 MXU feeds + approximate reciprocal vs the f32 reference.
    assert jnp.allclose(out, ref, atol=2e-2, rtol=2e-2), float(jnp.max(jnp.abs(out - ref)))
    assert jnp.allclose(jnp.sum(out, axis=-1), 1.0, atol=1e-2)

    print("KERNEL_OK")
</pallas_src>

<mosaic_0001>
module attributes {stable_mosaic.version = 11 : i64} {
  func.func @_mlp_kernel(%arg0: i32, %arg1: memref<128x32xf32, #tpu.memory_space<vmem>>, %arg2: memref<16x32xbf16, #tpu.memory_space<vmem>>, %arg3: memref<8x16xbf16, #tpu.memory_space<vmem>>, %arg4: memref<4x8xbf16, #tpu.memory_space<vmem>>, %arg5: memref<16x3xf32, #tpu.memory_space<vmem>>, %arg6: memref<4x128xf32, #tpu.memory_space<vmem>>) attributes {dimension_semantics = [#tpu.dimension_semantics<parallel>], iteration_bounds = array<i64: 2>, scalar_prefetch = 0 : i64, scratch_operands = 0 : i64, tpu.core_type = #tpu.core_type<tc>, window_params = [{transform_indices = @transform_0, window_bounds = array<i64: 128, 32>}, {pipeline_mode = #tpu.pipeline_mode<synchronous>, transform_indices = @transform_1, window_bounds = array<i64: 16, 32>}, {pipeline_mode = #tpu.pipeline_mode<synchronous>, transform_indices = @transform_2, window_bounds = array<i64: 8, 16>}, {pipeline_mode = #tpu.pipeline_mode<synchronous>, transform_indices = @transform_3, window_bounds = array<i64: 4, 8>}, {pipeline_mode = #tpu.pipeline_mode<synchronous>, transform_indices = @transform_4, window_bounds = array<i64: 16, 3>}, {transform_indices = @transform_5, window_bounds = array<i64: 4, 128>}]} {
    %c128_i32 = arith.constant 128 : i32
    %0 = arith.muli %arg0, %c128_i32 : i32
    %1 = tpu.iota {dimensions = array<i32: 1>} : vector<1x128xi32>
    %2 = vector.broadcast %0 : i32 to vector<1x128xi32>
    %3 = arith.addi %2, %1 : vector<1x128xi32>
    %c200_i32 = arith.constant 200 : i32
    %4 = vector.broadcast %c200_i32 : i32 to vector<1x128xi32>
    %5 = arith.cmpi slt, %3, %4 : vector<1x128xi32>
    %c0 = arith.constant 0 : index
    %c0_0 = arith.constant 0 : index
    %6 = vector.load %arg2[%c0, %c0_0] : memref<16x32xbf16, #tpu.memory_space<vmem>>, vector<16x32xbf16>
    %c0_1 = arith.constant 0 : index
    %c0_2 = arith.constant 0 : index
    %7 = vector.load %arg1[%c0_1, %c0_2] : memref<128x32xf32, #tpu.memory_space<vmem>>, vector<128x32xf32>
    %8 = arith.truncf %7 : vector<128x32xf32> to vector<128x32xbf16>
    %cst = arith.constant dense<0.000000e+00> : vector<16x128xf32>
    %9 = tpu.matmul %6, %8, %cst {dimension_numbers = #tpu.dot_dimension_numbers<[1], [1], [0], [0], [0, 0, 1, 0], [], []>} : vector<16x32xbf16>, vector<128x32xbf16>, vector<16x128xf32> -> vector<16x128xf32>
    %c0_3 = arith.constant 0 : index
    %c0_4 = arith.constant 0 : index
    %10 = vector.load %arg5[%c0_3, %c0_4] : memref<16x3xf32, #tpu.memory_space<vmem>>, vector<16x1xf32>
    %11 = vector.broadcast %10 : vector<16x1xf32> to vector<16x128xf32>
    %12 = arith.addf %9, %11 : vector<16x128xf32>
    %cst_5 = arith.constant 0.000000e+00 : f32
    %13 = vector.broadcast %cst_5 : f32 to vector<16x128xf32>
    %14 = arith.maximumf %12, %13 : vector<16x128xf32>
    %cst_6 = arith.constant 0.000000e+00 : f32
    %15 = vector.shape_cast %5 : vector<1x128xi1> to vector<1x128xi1>
    %16 = vector.broadcast %15 : vector<1x128xi1> to vector<16x128xi1>
    %17 = vector.broadcast %cst_6 : f32 to vector<16x128xf32>
    %18 = arith.select %16, %14, %17 : vector<16x128xi1>, vector<16x128xf32>
    %c0_7 = arith.constant 0 : index
    %c0_8 = arith.constant 0 : index
    %19 = vector.load %arg3[%c0_7, %c0_8] : memref<8x16xbf16, #tpu.memory_space<vmem>>, vector<8x16xbf16>
    %20 = arith.truncf %18 : vector<16x128xf32> to vector<16x128xbf16>
    %cst_9 = arith.constant dense<0.000000e+00> : vector<8x128xf32>
    %21 = tpu.matmul %19, %20, %cst_9 {dimension_numbers = #tpu.dot_dimension_numbers<[1], [0], [0], [1], [0, 0, 1, 1], [], []>} : vector<8x16xbf16>, vector<16x128xbf16>, vector<8x128xf32> -> vector<8x128xf32>
    %c0_10 = arith.constant 0 : index
    %c1 = arith.constant 1 : index
    %22 = vector.load %arg5[%c0_10, %c1] : memref<16x3xf32, #tpu.memory_space<vmem>>, vector<8x1xf32>
    %23 = vector.broadcast %22 : vector<8x1xf32> to vector<8x128xf32>
    %24 = arith.addf %21, %23 : vector<8x128xf32>
    %cst_11 = arith.constant 0.000000e+00 : f32
    %25 = vector.broadcast %cst_11 : f32 to vector<8x128xf32>
    %26 = arith.maximumf %24, %25 : vector<8x128xf32>
    %c0_12 = arith.constant 0 : index
    %c0_13 = arith.constant 0 : index
    %27 = vector.load %arg4[%c0_12, %c0_13] : memref<4x8xbf16, #tpu.memory_space<vmem>>, vector<4x8xbf16>
    %28 = arith.truncf %26 : vector<8x128xf32> to vector<8x128xbf16>
    %cst_14 = arith.constant dense<0.000000e+00> : vector<4x128xf32>
    %29 = tpu.matmul %27, %28, %cst_14 {dimension_numbers = #tpu.dot_dimension_numbers<[1], [0], [0], [1], [0, 0, 1, 1], [], []>} : vector<4x8xbf16>, vector<8x128xbf16>, vector<4x128xf32> -> vector<4x128xf32>
    %c0_15 = arith.constant 0 : index
    %c2 = arith.constant 2 : index
    %30 = vector.load %arg5[%c0_15, %c2] : memref<16x3xf32, #tpu.memory_space<vmem>>, vector<4x1xf32>
    %31 = vector.broadcast %30 : vector<4x1xf32> to vector<4x128xf32>
    %32 = arith.addf %29, %31 : vector<4x128xf32>
    %cst_16 = arith.constant dense<0xFF800000> : vector<128xf32>
    %33 = vector.multi_reduction <maximumf>, %32, %cst_16 [0] : vector<4x128xf32> to vector<128xf32>
    %34 = vector.shape_cast %33 : vector<128xf32> to vector<1x128xf32>
    %35 = vector.broadcast %34 : vector<1x128xf32> to vector<4x128xf32>
    %36 = arith.subf %32, %35 : vector<4x128xf32>
    %37 = math.exp %36 : vector<4x128xf32>
    %cst_17 = arith.constant dense<0.000000e+00> : vector<128xf32>
    %38 = vector.multi_reduction <add>, %37, %cst_17 [0] : vector<4x128xf32> to vector<128xf32>
    %39 = vector.shape_cast %38 : vector<128xf32> to vector<1x128xf32>
    %40 = tpu.reciprocal %39 {approx = true} : vector<1x128xf32> -> vector<1x128xf32>
    %41 = vector.broadcast %40 : vector<1x128xf32> to vector<4x128xf32>
    %42 = arith.mulf %37, %41 : vector<4x128xf32>
    %c0_18 = arith.constant 0 : index
    %c0_19 = arith.constant 0 : index
    %43 = vector.load %arg6[%c0_18, %c0_19] : memref<4x128xf32, #tpu.memory_space<vmem>>, vector<4x128xf32>
    tpu.vector_store %arg6[%c0_18, %c0_19], %42 {strides = array<i32>} : memref<4x128xf32, #tpu.memory_space<vmem>>, vector<4x128xf32>,
    return
  }
  func.func @transform_0(%arg0: i32) -> (i32, i32) {
    %c0_i32 = arith.constant 0 : i32
    %c0_i32_0 = arith.constant 0 : i32
    return %arg0, %c0_i32 : i32, i32
  }
  func.func @transform_1(%arg0: i32) -> (i32, i32) {
    %c0_i32 = arith.constant 0 : i32
    %c0_i32_0 = arith.constant 0 : i32
    %c0_i32_1 = arith.constant 0 : i32
    return %c0_i32, %c0_i32_0 : i32, i32
  }
  func.func @transform_2(%arg0: i32) -> (i32, i32) {
    %c0_i32 = arith.constant 0 : i32
    %c0_i32_0 = arith.constant 0 : i32
    %c0_i32_1 = arith.constant 0 : i32
    return %c0_i32, %c0_i32_0 : i32, i32
  }
  func.func @transform_3(%arg0: i32) -> (i32, i32) {
    %c0_i32 = arith.constant 0 : i32
    %c0_i32_0 = arith.constant 0 : i32
    %c0_i32_1 = arith.constant 0 : i32
    return %c0_i32, %c0_i32_0 : i32, i32
  }
  func.func @transform_4(%arg0: i32) -> (i32, i32) {
    %c0_i32 = arith.constant 0 : i32
    %c0_i32_0 = arith.constant 0 : i32
    %c0_i32_1 = arith.constant 0 : i32
    return %c0_i32, %c0_i32_0 : i32, i32
  }
  func.func @transform_5(%arg0: i32) -> (i32, i32) {
    %c0_i32 = arith.constant 0 : i32
    %c0_i32_0 = arith.constant 0 : i32
    return %c0_i32, %arg0 : i32, i32
  }
}

</mosaic_0001>

<llo_original>
// kernel: tpu_custom_call.1
$region0: #{tpu_custom_call.1}
  #allocation0 [shape = 'u32[]', space=smem, size = 0x4, offset = 0x4, fixed_abs, tag = 'smem constant byte address 0x4 - core index']
  #allocation1 [shape = 'u32[72,128]{1,0:T(1,128)}', space=vmem, size = 0x9000, scoped, tag = 'internal scratch']
  %s0 = inlined_call_operand.vmem [shape: f32[200,32], index: 0, kind: input, shape index: {}]
  %s1 = inlined_call_operand.vmem [shape: bf16[16,32], index: 1, kind: input, shape index: {}]
  %s2 = inlined_call_operand.vmem [shape: bf16[8,16], index: 2, kind: input, shape index: {}]
  %s3 = inlined_call_operand.vmem [shape: bf16[4,8], index: 3, kind: input, shape index: {}]
  %s4 = inlined_call_operand.vmem [shape: f32[16,3], index: 4, kind: input, shape index: {}]
  %s5 = inlined_call_operand.hbm [shape: f32[4,200], index: 5, kind: output, shape index: {}]
  %s6 = sld [smem:[#allocation0]]
  $region53: #{tpu_custom_call.1} parent=0
    _
  %s8 = ssub.s32 1, %s6
  %s9 = scalar_select 0, %s8, %s6
  $region1: #{tpu_custom_call.1} parent=0
    #allocation2 [shape = 'u8[4096]{0}', space=vmem, size = 0x1000, scoped, tag = 'output window, operand 0']
    #allocation3 [shape = 's32[2]{0}', space=sflag, size = 0x8, scoped, tag = 'scoped memory for tpu_custom_call.1']
    %10 = vsyncpa [#allocation3], 0
    %s11 = scalar_lea.sflag [#allocation3], 1
    %12 = vsyncpa %s11, 0
    loop: start=0, step=1, limit=4
    $region2: #{tpu_custom_call.1} parent=1 // loop_pre_header
      _
    $region3: #{tpu_custom_call.1} parent=1 // loop_header
      %s14 = sphi 0, %s18
      %p15 = scmp.ge.s32.totalorder %s14, 4
      %s24 = sphi 0, %s26
      %s27 = sphi 0, %s24
      %s28 = sphi 0, %s27
      %s44 = sphi 0, %s28
      %s48 = sphi 0, %s48
      %s50 = sphi 0, %s48
      %s51 = sphi 0, %s50
      %s65 = sphi 0, %s51
      %s69 = sphi 0, %s69
      %s71 = sphi 0, %s69
      %s72 = sphi 0, %s71
      %s86 = sphi 0, %s72
      %s90 = sphi 0, %s90
      %s92 = sphi 0, %s90
      %s93 = sphi 0, %s92
      %s107 = sphi 0, %s93
      %s111 = sphi 0, %s111
      %s113 = sphi 0, %s111
      %s114 = sphi 0, %s113
      %s128 = sphi 0, %s114
      %s134 = sphi 0, %s136
      %s137 = sphi 0, %s134
      %s138 = sphi 0, %s137
      %s154 = sphi 0, %s138
    $region4: #{tpu_custom_call.1} parent=1 // loop_header_branch
      %17 = sbr.rel (%p15) target = $region8
    $region5: #{tpu_custom_call.1} parent=1 // loop_body
      %s19 = ssub.s32 %s14, 1
      %s20 = ssub.s32 %s14, 2
      %s21 = sadd.s32 %s14, 1
      %s22 = ssub.s32 %s14, %s21
      %p23 = scmp.eq.s32.totalorder %s22, 0
      %s25 = sadd.s32 %s24, 1
      %s26 = scalar_select %p23, %s24, %s25
      %p29 = pneg %p23
      %p30 = scmp.eq.s32.totalorder %s14, 1
      %p31 = por %p29, %p30
      %p32 = scmp.ne.s32.totalorder %s24, %s27
      %p33 = scmp.eq.s32.totalorder %s14, 0
      %p34 = por %p32, %p33
      %p35 = scmp.ne.s32.totalorder %s24, %s27
      %p36 = scmp.eq.s32.totalorder %s19, 1
      %p37 = por %p35, %p36
      %p38 = scmp.ne.s32.totalorder %s27, %s28
      %p39 = scmp.eq.s32.totalorder %s19, 0
      %p40 = por %p38, %p39
      %p41 = scmp.ne.s32.totalorder %s27, %s28
      %p42 = scmp.eq.s32.totalorder %s20, 1
      %p43 = por %p41, %p42
      %p45 = scmp.ne.s32.totalorder %s28, %s44
      %p46 = scmp.eq.s32.totalorder %s20, 0
      %p47 = por %p45, %p46
      %s49 = sadd.s32 %s48, 1
      %p52 = scmp.eq.s32.totalorder %s14, 1
      %p53 = scmp.ne.s32.totalorder %s48, %s50
      %p54 = scmp.eq.s32.totalorder %s14, 0
      %p55 = por %p53, %p54
      %p56 = scmp.ne.s32.totalorder %s48, %s50
      %p57 = scmp.eq.s32.totalorder %s19, 1
      %p58 = por %p56, %p57
      %p59 = scmp.ne.s32.totalorder %s50, %s51
      %p60 = scmp.eq.s32.totalorder %s19, 0
      %p61 = por %p59, %p60
      %p62 = scmp.ne.s32.totalorder %s50, %s51
      %p63 = scmp.eq.s32.totalorder %s20, 1
      %p64 = por %p62, %p63
      %p66 = scmp.ne.s32.totalorder %s51, %s65
      %p67 = scmp.eq.s32.totalorder %s20, 0
      %p68 = por %p66, %p67
      %s70 = sadd.s32 %s69, 1
      %p73 = scmp.eq.s32.totalorder %s14, 1
      %p74 = scmp.ne.s32.totalorder %s69, %s71
      %p75 = scmp.eq.s32.totalorder %s14, 0
      %p76 = por %p74, %p75
      %p77 = scmp.ne.s32.totalorder %s69, %s71
      %p78 = scmp.eq.s32.totalorder %s19, 1
      %p79 = por %p77, %p78
      %p80 = scmp.ne.s32.totalorder %s71, %s72
      %p81 = scmp.eq.s32.totalorder %s19, 0
      %p82 = por %p80, %p81
      %p83 = scmp.ne.s32.totalorder %s71, %s72
      %p84 = scmp.eq.s32.totalorder %s20, 1
      %p85 = por %p83, %p84
      %p87 = scmp.ne.s32.totalorder %s72, %s86
      %p88 = scmp.eq.s32.totalorder %s20, 0
      %p89 = por %p87, %p88
      %s91 = sadd.s32 %s90, 1
      %p94 = scmp.eq.s32.totalorder %s14, 1
      %p95 = scmp.ne.s32.totalorder %s90, %s92
      %p96 = scmp.eq.s32.totalorder %s14, 0
      %p97 = por %p95, %p96
      %p98 = scmp.ne.s32.totalorder %s90, %s92
      %p99 = scmp.eq.s32.totalorder %s19, 1
      %p100 = por %p98, %p99
      %p101 = scmp.ne.s32.totalorder %s92, %s93
      %p102 = scmp.eq.s32.totalorder %s19, 0
      %p103 = por %p101, %p102
      %p104 = scmp.ne.s32.totalorder %s92, %s93
      %p105 = scmp.eq.s32.totalorder %s20, 1
      %p106 = por %p104, %p105
      %p108 = scmp.ne.s32.totalorder %s93, %s107
      %p109 = scmp.eq.s32.totalorder %s20, 0
      %p110 = por %p108, %p109
      %s112 = sadd.s32 %s111, 1
      %p115 = scmp.eq.s32.totalorder %s14, 1
      %p116 = scmp.ne.s32.totalorder %s111, %s113
      %p117 = scmp.eq.s32.totalorder %s14, 0
      %p118 = por %p116, %p117
      %p119 = scmp.ne.s32.totalorder %s111, %s113
      %p120 = scmp.eq.s32.totalorder %s19, 1
      %p121 = por %p119, %p120
      %p122 = scmp.ne.s32.totalorder %s113, %s114
      %p123 = scmp.eq.s32.totalorder %s19, 0
      %p124 = por %p122, %p123
      %p125 = scmp.ne.s32.totalorder %s113, %s114
      %p126 = scmp.eq.s32.totalorder %s20, 1
      %p127 = por %p125, %p126
      %p129 = scmp.ne.s32.totalorder %s114, %s128
      %p130 = scmp.eq.s32.totalorder %s20, 0
      %p131 = por %p129, %p130
      %s132 = ssub.s32 %s14, %s21
      %p133 = scmp.eq.s32.totalorder %s132, 0
      %s135 = sadd.s32 %s134, 1
      %s136 = scalar_select %p133, %s134, %s135
      %p139 = pneg %p133
      %p140 = scmp.eq.s32.totalorder %s14, 1
      %p141 = por %p139, %p140
      %p142 = scmp.ne.s32.totalorder %s134, %s137
      %p143 = scmp.eq.s32.totalorder %s14, 0
      %p144 = por %p142, %p143
      %p145 = scmp.ne.s32.totalorder %s134, %s137
      %p146 = scmp.eq.s32.totalorder %s19, 1
      %p147 = por %p145, %p146
      %p148 = scmp.ne.s32.totalorder %s137, %s138
      %p149 = scmp.eq.s32.totalorder %s19, 0
      %p150 = por %p148, %p149
      %p151 = scmp.ne.s32.totalorder %s137, %s138
      %p152 = scmp.eq.s32.totalorder %s20, 1
      %p153 = por %p151, %p152
      %p155 = scmp.ne.s32.totalorder %s138, %s154
      %p156 = scmp.eq.s32.totalorder %s20, 0
      %p157 = por %p155, %p156
      %p158 = scmp.le.s32.totalorder 1, %s14
      %p159 = scmp.lt.s32.totalorder %s14, 3
      %p160 = pnand %p158, %p159
      %p161 = pneg %p160
      // Predicated region
      $region9: #{tpu_custom_call.1} parent=5 // pred_check
        _
      $region10: #{tpu_custom_call.1} parent=5 // pred_check_branch
        %163 = sbr.rel (%p160) target = $region12
      $region11: #{tpu_custom_call.1} parent=5 // pred_region
        %s164 = ssub.s32 %s14, 1
        // Predicated region
        $region13: #{tpu_custom_call.1} parent=11 // pred_check
          %p165 = pneg %p61
        $region14: #{tpu_custom_call.1} parent=11 // pred_check_branch
          %167 = sbr.rel (%p165) target = $region16
        $region15: #{tpu_custom_call.1} parent=11 // pred_region
          _
        $region16: #{tpu_custom_call.1} parent=11 // pred_fallthru
          _
        // Predicated region
        $region17: #{tpu_custom_call.1} parent=11 // pred_check
          %p168 = pneg %p82
        $region18: #{tpu_custom_call.1} parent=11 // pred_check_branch
          %170 = sbr.rel (%p168) target = $region20
        $region19: #{tpu_custom_call.1} parent=11 // pred_region
          _
        $region20: #{tpu_custom_call.1} parent=11 // pred_fallthru
          _
        // Predicated region
        $region21: #{tpu_custom_call.1} parent=11 // pred_check
          %p171 = pneg %p103
        $region22: #{tpu_custom_call.1} parent=11 // pred_check_branch
          %173 = sbr.rel (%p171) target = $region24
        $region23: #{tpu_custom_call.1} parent=11 // pred_region
          _
        $region24: #{tpu_custom_call.1} parent=11 // pred_fallthru
          _
        // Predicated region
        $region25: #{tpu_custom_call.1} parent=11 // pred_check
          %p174 = pneg %p124
        $region26: #{tpu_custom_call.1} parent=11 // pred_check_branch
          %176 = sbr.rel (%p174) target = $region28
        $region27: #{tpu_custom_call.1} parent=11 // pred_region
          _
        $region28: #{tpu_custom_call.1} parent=11 // pred_fallthru
          _
      $region12: #{tpu_custom_call.1} parent=5 // pred_fallthru
        _
      %p177 = scmp.lt.s32.totalorder %s14, 2
      // Predicated region
      $region29: #{tpu_custom_call.1} parent=5 // pred_check
        %p178 = pneg %p177
      $region30: #{tpu_custom_call.1} parent=5 // pred_check_branch
        %180 = sbr.rel (%p178) target = $region32
      $region31: #{tpu_custom_call.1} parent=5 // pred_region
        // Predicated region
        $region33: #{tpu_custom_call.1} parent=31 // pred_check
          %p181 = pneg %p34
        $region34: #{tpu_custom_call.1} parent=31 // pred_check_branch
          %183 = sbr.rel (%p181) target = $region36
        $region35: #{tpu_custom_call.1} parent=31 // pred_region
          %s184 = smul.u32 16, %s14
          %s185 = ssub.s32 25, %s184
          %p186 = scmp.lt.s32.totalorder %s185, 16
          %s187 = scalar_select %p186, %s185, 16
          %s188 = smul.u32 8, %s187
          %p189 = scmp.lt.s32.totalorder %s184, 24
          %s190 = scalar_select %p189, %s184, 24
          %s191 = smul.addr %s190, 8
          %s192 = scalar_lea.vmem %s0, %s191
          %s193 = smul.u32 16, %s14
          %s194 = ssub.s32 25, %s193
          %p195 = scmp.lt.s32.totalorder %s194, 16
          %s196 = scalar_select %p195, %s194, 16
          %s197 = smul.u32 8, %s196
        $region36: #{tpu_custom_call.1} parent=31 // pred_fallthru
          _
      $region32: #{tpu_custom_call.1} parent=5 // pred_fallthru
        _
      %p198 = scmp.le.s32.totalorder 1, %s14
      %p199 = scmp.lt.s32.totalorder %s14, 3
      %p200 = pnand %p198, %p199
      %p201 = pneg %p200
      // Predicated region
      $region37: #{tpu_custom_call.1} parent=5 // pred_check
        _
      $region38: #{tpu_custom_call.1} parent=5 // pred_check_branch
        %203 = sbr.rel (%p200) target = $region40
      $region39: #{tpu_custom_call.1} parent=5 // pred_region
        %s204 = ssub.s32 %s14, 1
        %s205 = smul.u32 16, %s19
        %s206 = ssub.s32 25, %s205
        %p207 = scmp.lt.s32.totalorder %s206, 16
        %s208 = scalar_select %p207, %s206, 16
        %s209 = smul.u32 8, %s208
        %p210 = scmp.lt.s32.totalorder %s205, 24
        %s211 = scalar_select %p210, %s205, 24
        %s212 = smul.addr %s211, 8
        %s213 = scalar_lea.vmem %s0, %s212
        %p214 = pneg %p40
        %p215 = pneg %p37
        %p216 = pneg %p61
        %p217 = pneg %p58
        %p218 = pneg %p82
        %p219 = pneg %p79
        %p220 = pneg %p103
        %p221 = pneg %p100
        %p222 = pneg %p124
        %p223 = pneg %p121
        %p224 = pneg %p150
        %p225 = pneg %p147
        %s226 = sand.u32 %s137, 1
        %s227 = scalar_lea.sflag [#allocation3], %s226
        %s228 = sand.u32 %s137, 1
        %s229 = smul.addr %s228, 4
        %s230 = scalar_lea.vmem [#allocation2], %s229
        %s231 = smul.u32 16, %s19
        %s232 = ssub.s32 25, %s231
        %p233 = scmp.lt.s32.totalorder %s232, 16
        %s234 = scalar_select %p233, %s232, 16
        %s235 = smul.u32 8, %s234
        %p236 = scmp.lt.s32.totalorder %s231, 24
        %s237 = scalar_select %p236, %s231, 24
        %s238 = smul.addr %s237, 8
        %s239 = scalar_lea.vmem %s0, %s238
        %s240 = smul.u32 16, %s19
        %s241 = ssub.s32 25, %s240
        %p242 = scmp.lt.s32.totalorder %s241, 16
        %s243 = scalar_select %p242, %s241, 16
        %s244 = smul.u32 8, %s243
        %s246 = smul.u32 %s19, 128
        %v247 = vlaneseq
        %v248 = vand.u32 %v247, 127
        %v249 = vstv %s246
        %v250 = vadd.s32 %v249, %v248
        %vm251 = vcmp.lt.s32.totalorder %v250, 200
        %v252 = vld [vmem:[%s1] sm:$0xf]
        %v253 = vld [vmem:[%s1 + $0x4] sm:$0xf]
        %v254 = vld [vmem:[%s239] sm:$0xff]
        %v255 = vld [vmem:[%s239 + $0x8] sm:$0xff]
        %v256 = vld [vmem:[%s239 + $0x10] sm:$0xff]
        %v257 = vld [vmem:[%s239 + $0x18] sm:$0xff]
        %v258 = vld [vmem:[%s239 + $0x20] sm:$0xff]
        %v259 = vld [vmem:[%s239 + $0x28] sm:$0xff]
        %v260 = vld [vmem:[%s239 + $0x30] sm:$0xff]
        %v261 = vld [vmem:[%s239 + $0x38] sm:$0xff]
        %v262 = vld [vmem:[%s239 + $0x40] sm:$0xff]
        %v263 = vld [vmem:[%s239 + $0x48] sm:$0xff]
        %v264 = vld [vmem:[%s239 + $0x50] sm:$0xff]
        %v265 = vld [vmem:[%s239 + $0x58] sm:$0xff]
        %v266 = vld [vmem:[%s239 + $0x60] sm:$0xff]
        %v267 = vld [vmem:[%s239 + $0x68] sm:$0xff]
        %v268 = vld [vmem:[%s239 + $0x70] sm:$0xff]
        %v269 = vld [vmem:[%s239 + $0x78] sm:$0xff]
        %v270 = vpack.c.bf16 %v255, %v254
        %v271 = vpack.c.bf16 %v257, %v256
        %v272 = vpack.c.bf16 %v259, %v258
        %v273 = vpack.c.bf16 %v261, %v260
        %v274 = vpack.c.bf16 %v263, %v262
        %v275 = vpack.c.bf16 %v265, %v264
        %v276 = vpack.c.bf16 %v267, %v266
        %v277 = vpack.c.bf16 %v269, %v268
        %v278 = vld [vmem:[%s4] sm:$0xff]
        %v279 = vld [vmem:[%s4 + $0x8] sm:$0xff]
        %281 = vset.pattern.permute.xlu0 0
        %282 = vperm.xlu0 %281, %v278
        %v283 = vpop.permute.xlu0 %282
        %286 = vset.pattern.permute.xlu0 0
        %287 = vperm.xlu0 %286, %v279
        %v288 = vpop.permute.xlu0 %287
        %v292 = vunpack.c.l.b16 %v252
        %v293 = vunpack.c.l.b16 %v253
        %v294 = vpack.c.b16 %v293, %v292
        %vm295 = vcmask 261120
        %v297 = vsel %vm295, %v294, 0
        %v300 = vsel %vm295, %v270, 0
        %v303 = vsel %vm295, %v271, 0
        %v306 = vsel %vm295, %v272, 0
        %v309 = vsel %vm295, %v273, 0
        %v312 = vsel %vm295, %v274, 0
        %v315 = vsel %vm295, %v275, 0
        %v318 = vsel %vm295, %v276, 0
        %v321 = vsel %vm295, %v277, 0
        %323 = vmatpush.bf16.xpose.msra.mxu0 %v321
        %324 = vmatpush.bf16.xpose.msra.mxu0 %v318
        %325 = vmatpush.bf16.xpose.msra.mxu0 %v315
        %326 = vmatpush.bf16.xpose.msra.mxu0 %v312
        %327 = vmatpush.bf16.xpose.msra.mxu0 %v309
        %328 = vmatpush.bf16.xpose.msra.mxu0 %v306
        %329 = vmatpush.bf16.xpose.msra.mxu0 %v303
        %330 = vmatpush.bf16.xpose.msra.mxu0 %v300
        %331 = vmatmul.bf16.gmra.mxu0 %v297
        %v332 = vpop.f32.mrf.mxu0
        %v333 = vadd.f32 %v283, %v332
        %v334 = vpop.f32.mrf.mxu0
        %v335 = vadd.f32 %v288, %v334
        %336 = vdwg.mxu0
        %v337 = vmax.f32 %v333, 0.0
        %v338 = vmax.f32 %v335, 0.0
        %v339 = vsel %vm251, 1, 0
        %vm340 = vcmp.eq.s32.totalorder %v339, 1
        %v341 = vsel %vm340, %v337, 0.0
        %v342 = vsel %vm340, %v338, 0.0
        %v343 = vld [vmem:[%s2] sm:$0xf]
        %v344 = vpack.c.bf16 %v342, %v341
        %v345 = vld [vmem:[%s4] sm:$0xff]
        %347 = vset.pattern.permute.xlu0 1
        %348 = vperm.xlu0 %347, %v345
        %v349 = vpop.permute.xlu0 %348
        %vm351 = vcmask 130048
        %v353 = vsel %vm351, %v343, 0
        %355 = vmatpush.bf16.msra.mxu0 0
        %356 = vmatpush.bf16.msra.mxu0 0
        %357 = vmatpush.bf16.msra.mxu0 0
        %358 = vmatpush.bf16.msra.mxu0 0
        %359 = vmatpush.bf16.msra.mxu0 0
        %360 = vmatpush.bf16.msra.mxu0 0
        %361 = vmatpush.bf16.msra.mxu0 0
        %362 = vmatpush.bf16.msra.mxu0 %v344
        %363 = vmatmul.bf16.gmra.mxu0 %v353
        %v364 = vpop.f32.mrf.mxu0
        %v365 = vadd.f32 %v349, %v364
        %v366 = vpop.f32.mrf.mxu0
        %367 = vdwg.mxu0
        %v368 = vmax.f32 %v365, 0.0
        %v369 = vld [vmem:[%s3] sm:$0x3]
        %v370 = vpack.c.bf16 %v368, %v368
        %v371 = vld [vmem:[%s4] sm:$0xf]
        %373 = vset.pattern.permute.xlu0 2
        %374 = vperm.xlu0 %373, %v371
        %v375 = vpop.permute.xlu0 %374
        %vm377 = vcmask 64512
        %v379 = vsel %vm377, %v369, 0
        %vm381 = vcmask 1043456
        %v383 = vsel %vm381, %v370, 0
        %385 = vmatpush.bf16.msra.mxu0 0
        %386 = vmatpush.bf16.msra.mxu0 0
        %387 = vmatpush.bf16.msra.mxu0 0
        %388 = vmatpush.bf16.msra.mxu0 0
        %389 = vmatpush.bf16.msra.mxu0 0
        %390 = vmatpush.bf16.msra.mxu0 0
        %391 = vmatpush.bf16.msra.mxu0 0
        %392 = vmatpush.bf16.msra.mxu0 %v383
        %393 = vmatmul.bf16.gmra.mxu0 %v379
        %v394 = vpop.f32.mrf.mxu0
        %v395 = vadd.f32 %v375, %v394
        %v396 = vpop.f32.mrf.mxu0
        %397 = vdwg.mxu0
        %v398 = vsel %vm381, %v395, -inf
        %v399 = vrot.slane %v398, 4
        %v400 = vmax.f32 %v398, %v399
        %v401 = vrot.slane %v400, 2
        %v402 = vmax.f32 %v400, %v401
        %v403 = vrot.slane %v402, 1
        %v404 = vmax.f32 %v402, %v403
        %v405 = vsub.f32 %v395, %v404
        %v406 = vmul.f32 %v405, 1.442695
        %v407 = vpow.pop %v406
        %v408 = vsel %vm381, %v407, 0.0
        %v409 = vrot.slane %v408, 4
        %v410 = vadd.f32 %v408, %v409
        %v411 = vrot.slane %v410, 2
        %v412 = vadd.f32 %v410, %v411
        %v413 = vrot.slane %v412, 1
        %v414 = vadd.f32 %v412, %v413
        %v415 = vrcp.pop %v414
        %v416 = vmul.f32 %v407, %v415
        %417 = vst [vmem:[%s230] sm:$0xf] %v416
        %s418 = sand.u32 %s137, 1
        %s419 = scalar_lea.sflag [#allocation3], %s418
        %s420 = sand.u32 %s137, 1
        %s421 = smul.addr %s420, 4
        %s422 = scalar_lea.vmem [#allocation2], %s421
        // Predicated region
        $region41: #{tpu_custom_call.1} parent=39 // pred_check
          %p423 = pneg %p147
        $region42: #{tpu_custom_call.1} parent=39 // pred_check_branch
          %425 = sbr.rel (%p423) target = $region44
        $region43: #{tpu_custom_call.1} parent=39 // pred_region
          %427 = vsyncadd %s419, 0
          %s428 = smul.addr %s19, 4
          %s429 = scalar_lea.hbm %s5, %s428
          %s431 = sshll.u32 %s422, 4
          %s432 = int_to_ptr.vmem [resolvable:$true] %s431
          %s433 = sshll.u32 %s429, 4
          %s434 = int_to_ptr.hbm [resolvable:$true] %s433
          %436 = dma.vmem_to_hbm [thread:$0]  %s432, 64, %s434, %s419
        $region44: #{tpu_custom_call.1} parent=39 // pred_fallthru
          _
      $region40: #{tpu_custom_call.1} parent=5 // pred_fallthru
        _
      %p437 = scmp.le.s32.totalorder 2, %s14
      // Predicated region
      $region45: #{tpu_custom_call.1} parent=5 // pred_check
        %p438 = pneg %p437
      $region46: #{tpu_custom_call.1} parent=5 // pred_check_branch
        %440 = sbr.rel (%p438) target = $region48
      $region47: #{tpu_custom_call.1} parent=5 // pred_region
        %s441 = ssub.s32 %s14, 2
        // Predicated region
        $region49: #{tpu_custom_call.1} parent=47 // pred_check
          %p442 = pneg %p153
        $region50: #{tpu_custom_call.1} parent=47 // pred_check_branch
          %444 = sbr.rel (%p442) target = $region52
        $region51: #{tpu_custom_call.1} parent=47 // pred_region
          %s445 = sand.u32 %s138, 1
          %s446 = scalar_lea.sflag [#allocation3], %s445
          %s447 = sand.u32 %s138, 1
          %s448 = smul.addr %s447, 4
          %s449 = scalar_lea.vmem [#allocation2], %s448
          %451 = dma.done %s446, 64
        $region52: #{tpu_custom_call.1} parent=47 // pred_fallthru
          _
      $region48: #{tpu_custom_call.1} parent=5 // pred_fallthru
        _
    $region6: #{tpu_custom_call.1} parent=1 // loop_footer
      %s18 = sadd.s32 1, %s14
    $region7: #{tpu_custom_call.1} parent=1 // loop_footer_branch
      %13 = sbr.rel target = $region3
    $region8: #{tpu_custom_call.1} parent=1 // loop_exit
      _
    %452 = vsyncpa [#allocation3], 1
    %s453 = scalar_lea.sflag [#allocation3], 1
    %454 = vsyncpa %s453, 1

</llo_original>
